<compile_context>
chip_gen: v7x
topology: tpu7x:2x2x1
jax: 0.10.0
libtpu: 0.0.40
codegen_flags: <defaults>
</compile_context>

<pallas_src>
import functools

import jax
import jax.numpy as jnp
from jax.experimental import pallas as pl
from jax.experimental.pallas import tpu as pltpu

_VMEM = pl.BlockSpec(memory_space=pltpu.MemorySpace.VMEM)


# ---------------------------------------------------------------------------
# Fused kernel
# ---------------------------------------------------------------------------
def _gru_update(g, h, H):
    """g: (B, 4H) f32 = [gi_r+gh_r | gi_z+gh_z | gi_n | gh_n], biases folded in."""
    rz = jax.nn.sigmoid(g[:, :2 * H])
    r = rz[:, :H]
    z = rz[:, H:2 * H]
    n = jnp.tanh(g[:, 2 * H:3 * H] + r * g[:, 3 * H:4 * H])
    return (1.0 - z) * n + z * h


def _decoder_fused_kernel(ids_ref, h_ref, w0_ref, w1_ref, ow_ref,
                          lp_ref, h_out_ref, *, n_layers, hid_dim, vocab):
    """
    ids_ref : (B, 1)        int32  token ids
    h_ref   : (B, H)        f32    initial hidden (aliased with h_out_ref)
    w0_ref  : (V+H+8, 4H)   bf16   layer-0 fused weight  [T | Wh | bias | 0]
    w1_ref  : (2H+8, 4H)    bf16   layer>=1 fused weight [Wi | Wh | bias | 0]
    ow_ref  : (H+8,  V)     bf16   output proj           [out_w | out_b | 0]
    lp_ref  : (B, V)        f32    log-probs out
    h_out_ref:(B, H)        f32    final hidden out
    """
    B = ids_ref.shape[0]
    H = hid_dim
    V = vocab

    h = h_ref[...]                                                      # (B, H) f32

    # one-hot row selector (exact in bf16: values are 0/1)
    ids = ids_ref[...]                                                  # (B, 1)
    onehot = (jax.lax.broadcasted_iota(jnp.int32, (B, V), 1) == ids).astype(jnp.float32)
    # constant-1 column (folds biases into the MXU matmul) + 7 zero pad columns;
    # shared by every layer and the output projection -> computed once.
    tail = (jax.lax.broadcasted_iota(jnp.int32, (B, 8), 1) == 0).astype(jnp.float32)

    # --- layer 0: gather + ReLU + Wi matmul + Wh matmul + biases in ONE matmul
    x0 = jnp.concatenate([onehot, h, tail], axis=1).astype(jnp.bfloat16)    # (B, V+H+8)
    g = jnp.dot(x0, w0_ref[...], preferred_element_type=jnp.float32)        # (B, 4H) f32
    h = _gru_update(g, h, H)

    # --- layers 1..n-1: one fused matmul per layer; h never leaves vregs
    for _ in range(n_layers - 1):
        xr = jnp.maximum(h, 0.0)
        x = jnp.concatenate([xr, h, tail], axis=1).astype(jnp.bfloat16)     # (B, 2H+8)
        g = jnp.dot(x, w1_ref[...], preferred_element_type=jnp.float32)
        h = _gru_update(g, h, H)

    # --- output projection (bias folded) + log_softmax
    xo = jnp.concatenate([h, tail], axis=1).astype(jnp.bfloat16)            # (B, H+8)
    logits = jnp.dot(xo, ow_ref[...], preferred_element_type=jnp.float32)   # (B, V)
    m = jnp.max(logits, axis=1, keepdims=True)
    shifted = logits - m
    lse = jnp.log(jnp.sum(jnp.exp(shifted), axis=1, keepdims=True))
    lp_ref[...] = shifted - lse
    h_out_ref[...] = h


# ---------------------------------------------------------------------------
# Wrapper
# ---------------------------------------------------------------------------
def decoder_forward(packed, input_ids, hidden, n_layers):
    """input_ids: (B,) int32, hidden: (1, B, H) f32 -> (log_probs (B,V), hidden (1,B,H))."""
    assert n_layers >= 1
    B = input_ids.shape[0]
    H = hidden.shape[-1]
    V = packed["ow"].shape[1]

    # sublane-dense batch (multiple of 8); pad rows are inert and sliced off
    Bp = max(8, ((B + 7) // 8) * 8)
    ids2d = jnp.zeros((Bp, 1), jnp.int32).at[:B, 0].set(input_ids.astype(jnp.int32))
    h0 = jnp.zeros((Bp, H), jnp.float32).at[:B].set(hidden.reshape(B, H))

    kernel = functools.partial(_decoder_fused_kernel,
                               n_layers=n_layers, hid_dim=H, vocab=V)

    log_probs, h_new = pl.pallas_call(
        kernel,
        out_shape=(jax.ShapeDtypeStruct((Bp, V), jnp.float32),
                   jax.ShapeDtypeStruct((Bp, H), jnp.float32)),
        in_specs=[_VMEM] * 5,
        out_specs=(_VMEM, _VMEM),
        input_output_aliases={1: 1},   # carried hidden state re-uses its input buffer
    )(ids2d, h0, packed["w0"], packed["w1"], packed["ow"])

    return log_probs[:B], h_new[:B].reshape(1, B, H)


# ---------------------------------------------------------------------------
# Parameter construction (PyTorch-style init) + packing into kernel layout
# ---------------------------------------------------------------------------
def make_params(key, vocab, emb_dim, hid_dim):
    """Natural layout: gate-stacked (3, in, H) weights and (3, 1, H) biases (r, z, n)."""
    k = jax.random.split(key, 8)
    bound_g = 1.0 / jnp.sqrt(hid_dim)    # nn.GRU default init
    bound_o = 1.0 / jnp.sqrt(hid_dim)    # nn.Linear default init
    return {
        "embedding": jax.random.normal(k[0], (vocab, emb_dim), jnp.float32),
        "gru_wi": jax.random.uniform(k[1], (3, emb_dim, hid_dim), jnp.float32,
                                     -bound_g, bound_g),
        "gru_wh": jax.random.uniform(k[2], (3, hid_dim, hid_dim), jnp.float32,
                                     -bound_g, bound_g),
        "gru_bi": jax.random.uniform(k[3], (3, 1, hid_dim), jnp.float32,
                                     -bound_g, bound_g),
        "gru_bh": jax.random.uniform(k[4], (3, 1, hid_dim), jnp.float32,
                                     -bound_g, bound_g),
        "out_w": jax.random.uniform(k[5], (hid_dim, vocab), jnp.float32,
                                    -bound_o, bound_o),
        "out_b": jax.random.uniform(k[6], (1, vocab), jnp.float32,
                                    -bound_o, bound_o),
    }


def pack_params(raw, hid_dim):
    """Build the three fused bf16 weight slabs consumed by the kernel.

    Column layout (4H lanes): [r | z | n_input | n_hidden].
    W0 rows: [T = ReLU(emb)@Wi (V) | Wh (H) | folded-bias row | 7 zero rows]
    W1 rows: [Wi (H)               | Wh (H) | folded-bias row | 7 zero rows]
    OW rows: [out_w (H)            | out_b row               | 7 zero rows]
    Bias row = [bi_r+bh_r | bi_z+bh_z | bi_n | bh_n]; it is picked up by the
    constant-1 column the kernel appends to every matmul input.
    """
    H = hid_dim
    V, E = raw["embedding"].shape
    assert E == H, "forward's .view(1, B, hidden_dim) requires emb_dim == hid_dim"
    GL = 4 * H

    wi_cat = jnp.concatenate([raw["gru_wi"][0], raw["gru_wi"][1], raw["gru_wi"][2]], axis=1)  # (E, 3H)
    wh_cat = jnp.concatenate([raw["gru_wh"][0], raw["gru_wh"][1], raw["gru_wh"][2]], axis=1)  # (H, 3H)
    bias = jnp.concatenate([raw["gru_bi"][0] + raw["gru_bh"][0],     # r (folded)
                            raw["gru_bi"][1] + raw["gru_bh"][1],     # z (folded)
                            raw["gru_bi"][2],                        # n input bias
                            raw["gru_bh"][2]], axis=1)[0]            # n hidden bias -> (4H,)

    # Pre-fold gather + first ReLU + first-layer input matmul (exact: one-hot
    # selects a single row, so ReLU commutes with the gather).
    T = jnp.maximum(raw["embedding"], 0.0) @ wi_cat                  # (V, 3H)

    w0 = jnp.zeros((V + H + 8, GL), jnp.float32)
    w0 = w0.at[:V, :3 * H].set(T)
    w0 = w0.at[V:V + H, :2 * H].set(wh_cat[:, :2 * H])
    w0 = w0.at[V:V + H, 3 * H:4 * H].set(wh_cat[:, 2 * H:3 * H])
    w0 = w0.at[V + H, :].set(bias)

    w1 = jnp.zeros((2 * H + 8, GL), jnp.float32)
    w1 = w1.at[:H, :3 * H].set(wi_cat)
    w1 = w1.at[H:2 * H, :2 * H].set(wh_cat[:, :2 * H])
    w1 = w1.at[H:2 * H, 3 * H:4 * H].set(wh_cat[:, 2 * H:3 * H])
    w1 = w1.at[2 * H, :].set(bias)

    ow = jnp.zeros((H + 8, V), jnp.float32)
    ow = ow.at[:H, :].set(raw["out_w"])
    ow = ow.at[H, :].set(raw["out_b"][0])

    return {"w0": w0.astype(jnp.bfloat16),
            "w1": w1.astype(jnp.bfloat16),
            "ow": ow.astype(jnp.bfloat16)}


# ---------------------------------------------------------------------------
# Pure-JAX reference (f32, correctness check only)
# ---------------------------------------------------------------------------
def decoder_forward_ref(raw, input_ids, hidden, n_layers):
    B = input_ids.shape[0]
    H = hidden.shape[-1]
    output = raw["embedding"][input_ids].reshape(B, H)
    h = hidden.reshape(B, H)
    for _ in range(n_layers):
        x = jnp.maximum(output, 0.0)
        gi = [x @ raw["gru_wi"][g] + raw["gru_bi"][g] for g in range(3)]
        gh = [h @ raw["gru_wh"][g] + raw["gru_bh"][g] for g in range(3)]
        r = jax.nn.sigmoid(gi[0] + gh[0])
        z = jax.nn.sigmoid(gi[1] + gh[1])
        n = jnp.tanh(gi[2] + r * gh[2])
        h = (1.0 - z) * n + z * h
        output = h
    logits = output @ raw["out_w"] + raw["out_b"]
    return jax.nn.log_softmax(logits, axis=1), h.reshape(1, B, H)


if __name__ == "__main__":
    # config = {'emb_dim': 32, 'hid_dim': 32, 'sum_vocab': 128,
    #           'num_layers': 2, 'dec_drop': 0.1}
    EMB = 32
    HID = 32          # forward's .view(1, B, hidden_dim) requires EMB == HID
    VOCAB = 128
    N_LAYERS = 2
    BATCH = 8

    key = jax.random.PRNGKey(0)
    kp, ki = jax.random.split(key)
    raw_params = make_params(kp, VOCAB, EMB, HID)
    packed_params = pack_params(raw_params, HID)

    input_ids = jax.random.randint(ki, (BATCH,), 0, VOCAB, dtype=jnp.int32)
    hidden0 = jnp.zeros((1, BATCH, HID), jnp.float32)   # Decoder.initHidden

    # f32 reference first (kernel's hidden input is a padded copy, so aliasing
    # never touches hidden0 itself)
    ref_lp, ref_h = decoder_forward_ref(raw_params, input_ids, hidden0, N_LAYERS)

    log_probs, hidden = decoder_forward(packed_params, input_ids, hidden0, N_LAYERS)
    log_probs = jax.block_until_ready(log_probs)
    hidden = jax.block_until_ready(hidden)

    assert log_probs.shape == (BATCH, VOCAB)
    assert hidden.shape == (1, BATCH, HID)
    # bf16 weight slabs -> loosened tolerance vs the full-f32 reference
    assert jnp.allclose(log_probs, ref_lp, atol=5e-2, rtol=2e-2), \
        float(jnp.max(jnp.abs(log_probs - ref_lp)))
    assert jnp.allclose(hidden, ref_h, atol=3e-2, rtol=2e-2), \
        float(jnp.max(jnp.abs(hidden - ref_h)))

    print("KERNEL_OK")
</pallas_src>

<mosaic_0001>
module attributes {stable_mosaic.version = 11 : i64} {
  func.func @_decoder_fused_kernel(%arg0: memref<8x1xi32, #tpu.memory_space<vmem>>, %arg1: memref<8x32xf32, #tpu.memory_space<vmem>>, %arg2: memref<168x128xbf16, #tpu.memory_space<vmem>>, %arg3: memref<72x128xbf16, #tpu.memory_space<vmem>>, %arg4: memref<40x128xbf16, #tpu.memory_space<vmem>>, %arg5: memref<8x128xf32, #tpu.memory_space<vmem>>, %arg6: memref<8x32xf32, #tpu.memory_space<vmem>>) attributes {dimension_semantics = [], scalar_prefetch = 0 : i64, scratch_operands = 0 : i64, tpu.core_type = #tpu.core_type<tc>} {
    %c0 = arith.constant 0 : index
    %c0_0 = arith.constant 0 : index
    %0 = vector.load %arg1[%c0, %c0_0] : memref<8x32xf32, #tpu.memory_space<vmem>>, vector<8x32xf32>
    %c0_1 = arith.constant 0 : index
    %c0_2 = arith.constant 0 : index
    %1 = vector.load %arg0[%c0_1, %c0_2] : memref<8x1xi32, #tpu.memory_space<vmem>>, vector<8x1xi32>
    %2 = tpu.iota {dimensions = array<i32: 1>} : vector<8x128xi32>
    %3 = vector.broadcast %1 : vector<8x1xi32> to vector<8x128xi32>
    %4 = arith.cmpi eq, %2, %3 : vector<8x128xi32>
    %5 = arith.extui %4 : vector<8x128xi1> to vector<8x128xi32>
    %6 = arith.sitofp %5 : vector<8x128xi32> to vector<8x128xf32>
    %7 = tpu.iota {dimensions = array<i32: 1>} : vector<8x8xi32>
    %c0_i32 = arith.constant 0 : i32
    %8 = vector.broadcast %c0_i32 : i32 to vector<8x8xi32>
    %9 = arith.cmpi eq, %7, %8 : vector<8x8xi32>
    %10 = arith.extui %9 : vector<8x8xi1> to vector<8x8xi32>
    %11 = arith.sitofp %10 : vector<8x8xi32> to vector<8x8xf32>
    %12 = tpu.concatenate %6, %0, %11 in 1 : vector<8x128xf32>, vector<8x32xf32>, vector<8x8xf32> -> vector<8x168xf32>
    %13 = arith.truncf %12 : vector<8x168xf32> to vector<8x168xbf16>
    %c0_3 = arith.constant 0 : index
    %c0_4 = arith.constant 0 : index
    %14 = vector.load %arg2[%c0_3, %c0_4] : memref<168x128xbf16, #tpu.memory_space<vmem>>, vector<168x128xbf16>
    %cst = arith.constant dense<0.000000e+00> : vector<8x128xf32>
    %15 = tpu.matmul %13, %14, %cst {dimension_numbers = #tpu.dot_dimension_numbers<[1], [0], [0], [1], [0, 0, 1, 1], [], []>} : vector<8x168xbf16>, vector<168x128xbf16>, vector<8x128xf32> -> vector<8x128xf32>
    %16 = vector.extract_strided_slice %15 {offsets = [0, 0], sizes = [8, 64], strides = [1, 1]} : vector<8x128xf32> to vector<8x64xf32>
    %17 = arith.negf %16 : vector<8x64xf32>
    %18 = math.exp %17 : vector<8x64xf32>
    %cst_5 = arith.constant 1.000000e+00 : f32
    %19 = vector.broadcast %cst_5 : f32 to vector<8x64xf32>
    %20 = arith.addf %19, %18 : vector<8x64xf32>
    %21 = arith.divf %19, %20 : vector<8x64xf32>
    %22 = vector.extract_strided_slice %21 {offsets = [0, 0], sizes = [8, 32], strides = [1, 1]} : vector<8x64xf32> to vector<8x32xf32>
    %23 = vector.extract_strided_slice %21 {offsets = [0, 32], sizes = [8, 32], strides = [1, 1]} : vector<8x64xf32> to vector<8x32xf32>
    %24 = vector.extract_strided_slice %15 {offsets = [0, 64], sizes = [8, 32], strides = [1, 1]} : vector<8x128xf32> to vector<8x32xf32>
    %25 = vector.extract_strided_slice %15 {offsets = [0, 96], sizes = [8, 32], strides = [1, 1]} : vector<8x128xf32> to vector<8x32xf32>
    %26 = arith.mulf %22, %25 : vector<8x32xf32>
    %27 = arith.addf %24, %26 : vector<8x32xf32>
    %28 = math.tanh %27 : vector<8x32xf32>
    %cst_6 = arith.constant 1.000000e+00 : f32
    %29 = vector.broadcast %cst_6 : f32 to vector<8x32xf32>
    %30 = arith.subf %29, %23 : vector<8x32xf32>
    %31 = arith.mulf %30, %28 : vector<8x32xf32>
    %32 = arith.mulf %23, %0 : vector<8x32xf32>
    %33 = arith.addf %31, %32 : vector<8x32xf32>
    %cst_7 = arith.constant 0.000000e+00 : f32
    %34 = vector.broadcast %cst_7 : f32 to vector<8x32xf32>
    %35 = arith.maximumf %33, %34 : vector<8x32xf32>
    %36 = tpu.concatenate %35, %33, %11 in 1 : vector<8x32xf32>, vector<8x32xf32>, vector<8x8xf32> -> vector<8x72xf32>
    %37 = arith.truncf %36 : vector<8x72xf32> to vector<8x72xbf16>
    %c0_8 = arith.constant 0 : index
    %c0_9 = arith.constant 0 : index
    %38 = vector.load %arg3[%c0_8, %c0_9] : memref<72x128xbf16, #tpu.memory_space<vmem>>, vector<72x128xbf16>
    %cst_10 = arith.constant dense<0.000000e+00> : vector<8x128xf32>
    %39 = tpu.matmul %37, %38, %cst_10 {dimension_numbers = #tpu.dot_dimension_numbers<[1], [0], [0], [1], [0, 0, 1, 1], [], []>} : vector<8x72xbf16>, vector<72x128xbf16>, vector<8x128xf32> -> vector<8x128xf32>
    %40 = vector.extract_strided_slice %39 {offsets = [0, 0], sizes = [8, 64], strides = [1, 1]} : vector<8x128xf32> to vector<8x64xf32>
    %41 = arith.negf %40 : vector<8x64xf32>
    %42 = math.exp %41 : vector<8x64xf32>
    %cst_11 = arith.constant 1.000000e+00 : f32
    %43 = vector.broadcast %cst_11 : f32 to vector<8x64xf32>
    %44 = arith.addf %43, %42 : vector<8x64xf32>
    %45 = arith.divf %43, %44 : vector<8x64xf32>
    %46 = vector.extract_strided_slice %45 {offsets = [0, 0], sizes = [8, 32], strides = [1, 1]} : vector<8x64xf32> to vector<8x32xf32>
    %47 = vector.extract_strided_slice %45 {offsets = [0, 32], sizes = [8, 32], strides = [1, 1]} : vector<8x64xf32> to vector<8x32xf32>
    %48 = vector.extract_strided_slice %39 {offsets = [0, 64], sizes = [8, 32], strides = [1, 1]} : vector<8x128xf32> to vector<8x32xf32>
    %49 = vector.extract_strided_slice %39 {offsets = [0, 96], sizes = [8, 32], strides = [1, 1]} : vector<8x128xf32> to vector<8x32xf32>
    %50 = arith.mulf %46, %49 : vector<8x32xf32>
    %51 = arith.addf %48, %50 : vector<8x32xf32>
    %52 = math.tanh %51 : vector<8x32xf32>
    %cst_12 = arith.constant 1.000000e+00 : f32
    %53 = vector.broadcast %cst_12 : f32 to vector<8x32xf32>
    %54 = arith.subf %53, %47 : vector<8x32xf32>
    %55 = arith.mulf %54, %52 : vector<8x32xf32>
    %56 = arith.mulf %47, %33 : vector<8x32xf32>
    %57 = arith.addf %55, %56 : vector<8x32xf32>
    %58 = tpu.concatenate %57, %11 in 1 : vector<8x32xf32>, vector<8x8xf32> -> vector<8x40xf32>
    %59 = arith.truncf %58 : vector<8x40xf32> to vector<8x40xbf16>
    %c0_13 = arith.constant 0 : index
    %c0_14 = arith.constant 0 : index
    %60 = vector.load %arg4[%c0_13, %c0_14] : memref<40x128xbf16, #tpu.memory_space<vmem>>, vector<40x128xbf16>
    %cst_15 = arith.constant dense<0.000000e+00> : vector<8x128xf32>
    %61 = tpu.matmul %59, %60, %cst_15 {dimension_numbers = #tpu.dot_dimension_numbers<[1], [0], [0], [1], [0, 0, 1, 1], [], []>} : vector<8x40xbf16>, vector<40x128xbf16>, vector<8x128xf32> -> vector<8x128xf32>
    %cst_16 = arith.constant dense<0xFF800000> : vector<8xf32>
    %62 = vector.multi_reduction <maximumf>, %61, %cst_16 [1] : vector<8x128xf32> to vector<8xf32>
    %63 = vector.shape_cast %62 : vector<8xf32> to vector<8x1xf32>
    %64 = vector.broadcast %63 : vector<8x1xf32> to vector<8x128xf32>
    %65 = arith.subf %61, %64 : vector<8x128xf32>
    %66 = math.exp %65 : vector<8x128xf32>
    %cst_17 = arith.constant dense<0.000000e+00> : vector<8xf32>
    %67 = vector.multi_reduction <add>, %66, %cst_17 [1] : vector<8x128xf32> to vector<8xf32>
    %68 = vector.shape_cast %67 : vector<8xf32> to vector<8x1xf32>
    %69 = math.log %68 : vector<8x1xf32>
    %70 = vector.broadcast %69 : vector<8x1xf32> to vector<8x128xf32>
    %71 = arith.subf %65, %70 : vector<8x128xf32>
    %c0_18 = arith.constant 0 : index
    %c0_19 = arith.constant 0 : index
    %72 = vector.load %arg5[%c0_18, %c0_19] : memref<8x128xf32, #tpu.memory_space<vmem>>, vector<8x128xf32>
    tpu.vector_store %arg5[%c0_18, %c0_19], %71 {strides = array<i32>} : memref<8x128xf32, #tpu.memory_space<vmem>>, vector<8x128xf32>,
    %c0_20 = arith.constant 0 : index
    %c0_21 = arith.constant 0 : index
    %73 = vector.load %arg6[%c0_20, %c0_21] : memref<8x32xf32, #tpu.memory_space<vmem>>, vector<8x32xf32>
    tpu.vector_store %arg6[%c0_20, %c0_21], %57 {strides = array<i32>} : memref<8x32xf32, #tpu.memory_space<vmem>>, vector<8x32xf32>,
    return
  }
}

</mosaic_0001>

<llo_original>
// kernel: tpu_custom_call.1
$region0: #{tpu_custom_call.1}
  #allocation0 [shape = 'u32[]', space=smem, size = 0x4, offset = 0x4, fixed_abs, tag = 'smem constant byte address 0x4 - core index']
  #allocation1 [shape = 'u32[144,128]{1,0:T(1,128)}', space=vmem, size = 0x12000, scoped, tag = 'internal scratch']
  %s0 = inlined_call_operand.vmem [shape: s32[8,1], index: 0, kind: input, shape index: {}]
  %s1 = inlined_call_operand.hbm [shape: f32[8,32], index: 1, kind: input, shape index: {}, may-alias: {1,6}]
  %s2 = inlined_call_operand.hbm [shape: bf16[168,128], index: 2, kind: input, shape index: {}]
  %s3 = inlined_call_operand.hbm [shape: bf16[72,128], index: 3, kind: input, shape index: {}]
  %s4 = inlined_call_operand.vmem [shape: bf16[40,128], index: 4, kind: input, shape index: {}]
  %s5 = inlined_call_operand.hbm [shape: f32[8,128], index: 5, kind: output, shape index: {0}]
  %s6 = inlined_call_operand.hbm [shape: f32[8,32], index: 6, kind: output, shape index: {1}, may-alias: {1,6}]
  %7 = xla_tuple %s5, %s6
  %s8 = sld [smem:[#allocation0]]
  $region50: #{tpu_custom_call.1} parent=0
    _
  %s10 = ssub.s32 1, %s8
  %s11 = scalar_select 0, %s10, %s8
  $region1: #{tpu_custom_call.1} parent=0
    #allocation2 [shape = 'u8[4096]{0}', space=vmem, size = 0x1000, scoped, tag = 'input window, operand 1, single buffered']
    #allocation3 [shape = 's32[1]{0}', space=sflag, size = 0x4, scoped, tag = 'scoped memory for tpu_custom_call.1']
    #allocation4 [shape = 's32[1]{0}', space=sflag, size = 0x4, scoped, tag = 'scoped memory for tpu_custom_call.1']
    #allocation5 [shape = 'u8[43008]{0}', space=vmem, size = 0xa800, scoped, tag = 'input window, operand 2, single buffered']
    #allocation6 [shape = 's32[1]{0}', space=sflag, size = 0x4, scoped, tag = 'scoped memory for tpu_custom_call.1']
    #allocation7 [shape = 'u8[18432]{0}', space=vmem, size = 0x4800, scoped, tag = 'input window, operand 3, single buffered']
    #allocation8 [shape = 'u8[4096]{0}', space=vmem, size = 0x1000, scoped, tag = 'output window, operand 0, single buffered']
    #allocation9 [shape = 'u8[4096]{0}', space=vmem, size = 0x1000, scoped, tag = 'output window, operand 1, single buffered']
    #allocation10 [shape = 's32[1]{0}', space=sflag, size = 0x4, scoped, tag = 'scoped memory for tpu_custom_call.1']
    %12 = vsyncpa [#allocation3], 0
    %13 = vsyncpa [#allocation6], 0
    %14 = vsyncpa [#allocation4], 0
    %15 = vsyncpa [#allocation10], 0
    // Predicated region
    $region2: #{tpu_custom_call.1} parent=1 // pred_check
      _
    $region3: #{tpu_custom_call.1} parent=1 // pred_check_branch
      %17 = sbr.rel (0) target = $region5
    $region4: #{tpu_custom_call.1} parent=1 // pred_region
      _
    $region5: #{tpu_custom_call.1} parent=1 // pred_fallthru
      _
    // Predicated region
    $region6: #{tpu_custom_call.1} parent=1 // pred_check
      _
    $region7: #{tpu_custom_call.1} parent=1 // pred_check_branch
      %19 = sbr.rel (0) target = $region9
    $region8: #{tpu_custom_call.1} parent=1 // pred_region
      %s21 = ssub.s32 128, 128
      %22 = vsyncadd [#allocation3], %s21
      %s24 = sshll.u32 [#allocation2], 4
      %s25 = int_to_ptr.vmem [resolvable:$true] %s24
      %27 = dma.hbm_to_vmem [thread:$0]  %s1, 128, %s25, [#allocation3]
    $region9: #{tpu_custom_call.1} parent=1 // pred_fallthru
      _
    // Predicated region
    $region10: #{tpu_custom_call.1} parent=1 // pred_check
      _
    $region11: #{tpu_custom_call.1} parent=1 // pred_check_branch
      %29 = sbr.rel (0) target = $region13
    $region12: #{tpu_custom_call.1} parent=1 // pred_region
      %s31 = ssub.s32 1344, 1344
      %32 = vsyncadd [#allocation6], %s31
      %s33 = sshll.u32 [#allocation5], 4
      %s34 = int_to_ptr.vmem [resolvable:$true] %s33
      %39 = dma.hbm_to_vmem [thread:$0]  %s2, 1344, %s34, [#allocation6], 64, 64, 4
    $region13: #{tpu_custom_call.1} parent=1 // pred_fallthru
      _
    // Predicated region
    $region14: #{tpu_custom_call.1} parent=1 // pred_check
      _
    $region15: #{tpu_custom_call.1} parent=1 // pred_check_branch
      %41 = sbr.rel (0) target = $region17
    $region16: #{tpu_custom_call.1} parent=1 // pred_region
      %s43 = ssub.s32 576, 576
      %44 = vsyncadd [#allocation6], %s43
      %s45 = sshll.u32 [#allocation7], 4
      %s46 = int_to_ptr.vmem [resolvable:$true] %s45
      %51 = dma.hbm_to_vmem [thread:$0]  %s3, 576, %s46, [#allocation6], 64, 64, 4
    $region17: #{tpu_custom_call.1} parent=1 // pred_fallthru
      _
    // Predicated region
    $region18: #{tpu_custom_call.1} parent=1 // pred_check
      _
    $region19: #{tpu_custom_call.1} parent=1 // pred_check_branch
      %53 = sbr.rel (0) target = $region21
    $region20: #{tpu_custom_call.1} parent=1 // pred_region
      _
    $region21: #{tpu_custom_call.1} parent=1 // pred_fallthru
      _
    // Predicated region
    $region22: #{tpu_custom_call.1} parent=1 // pred_check
      _
    $region23: #{tpu_custom_call.1} parent=1 // pred_check_branch
      %55 = sbr.rel (0) target = $region25
    $region24: #{tpu_custom_call.1} parent=1 // pred_region
      %56 = dma.done [#allocation3], 128
    $region25: #{tpu_custom_call.1} parent=1 // pred_fallthru
      _
    // Predicated region
    $region26: #{tpu_custom_call.1} parent=1 // pred_check
      _
    $region27: #{tpu_custom_call.1} parent=1 // pred_check_branch
      %58 = sbr.rel (0) target = $region29
    $region28: #{tpu_custom_call.1} parent=1 // pred_region
      %59 = dma.done [#allocation6], 1344
    $region29: #{tpu_custom_call.1} parent=1 // pred_fallthru
      _
    // Predicated region
    $region30: #{tpu_custom_call.1} parent=1 // pred_check
      _
    $region31: #{tpu_custom_call.1} parent=1 // pred_check_branch
      %61 = sbr.rel (0) target = $region33
    $region32: #{tpu_custom_call.1} parent=1 // pred_region
      %62 = dma.done [#allocation6], 576
    $region33: #{tpu_custom_call.1} parent=1 // pred_fallthru
      _
    %v64 = vld [vmem:[#allocation2] sm:$0xff]
    %v65 = vld [vmem:[%s0] sm:$0xff]
    %v66 = vlaneseq
    %v67 = vand.u32 %v66, 127
    %68 = vset.pattern.permute.xlu0 0
    %69 = vperm.xlu0 %68, %v65
    %v70 = vpop.permute.xlu0 %69
    %vm71 = vcmp.eq.s32.totalorder %v67, %v70
    %v72 = vsel %vm71, 1, 0
    %v73 = vcvt.s32.f32 %v72
    %vm74 = vcmp.eq.s32.totalorder %v67, 0
    %v75 = vsel %vm74, 1, 0
    %v76 = vcvt.s32.f32 %v75
    %78 = vrot.lane.b32.xlu0 %v76, 32
    %v79 = vpop.permute.xlu0 %78
    %vm81 = vcmask 261120
    %v82 = vsel %vm81, %v64, %v79
    %v83 = vpack.c.bf16 %v73, %v73
    %v84 = vpack.c.bf16 %v82, %v82
    %v85 = vld [vmem:[#allocation5] sm:$0xf]
    %v86 = vld [vmem:[#allocation5 + $0x4] sm:$0xf]
    %v87 = vld [vmem:[#allocation5 + $0x8] sm:$0xf]
    %v88 = vld [vmem:[#allocation5 + $0xc] sm:$0xf]
    %v89 = vld [vmem:[#allocation5 + $0x10] sm:$0xf]
    %v90 = vld [vmem:[#allocation5 + $0x14] sm:$0xf]
    %v91 = vld [vmem:[#allocation5 + $0x18] sm:$0xf]
    %v92 = vld [vmem:[#allocation5 + $0x1c] sm:$0xf]
    %v93 = vld [vmem:[#allocation5 + $0x20] sm:$0xf]
    %v94 = vld [vmem:[#allocation5 + $0x24] sm:$0xf]
    %v95 = vld [vmem:[#allocation5 + $0x28] sm:$0xf]
    %v96 = vld [vmem:[#allocation5 + $0x2c] sm:$0xf]
    %v97 = vld [vmem:[#allocation5 + $0x30] sm:$0xf]
    %v98 = vld [vmem:[#allocation5 + $0x34] sm:$0xf]
    %v99 = vld [vmem:[#allocation5 + $0x38] sm:$0xf]
    %v100 = vld [vmem:[#allocation5 + $0x3c] sm:$0xf]
    %v101 = vld [vmem:[#allocation5 + $0x40] sm:$0xf]
    %v102 = vld [vmem:[#allocation5 + $0x44] sm:$0xf]
    %v103 = vld [vmem:[#allocation5 + $0x48] sm:$0xf]
    %v104 = vld [vmem:[#allocation5 + $0x4c] sm:$0xf]
    %v105 = vld [vmem:[#allocation5 + $0x50] sm:$0xf]
    %v127 = vunpack.c.l.b16 %v85
    %v128 = vunpack.c.l.b16 %v86
    %v129 = vunpack.c.l.b16 %v87
    %v130 = vunpack.c.l.b16 %v88
    %v131 = vunpack.c.l.b16 %v89
    %v132 = vunpack.c.l.b16 %v90
    %v133 = vunpack.c.l.b16 %v91
    %v134 = vunpack.c.l.b16 %v92
    %v135 = vunpack.c.l.b16 %v93
    %v136 = vunpack.c.l.b16 %v94
    %v137 = vunpack.c.l.b16 %v95
    %v138 = vunpack.c.l.b16 %v96
    %v139 = vunpack.c.l.b16 %v97
    %v140 = vunpack.c.l.b16 %v98
    %v141 = vunpack.c.l.b16 %v99
    %v142 = vunpack.c.l.b16 %v100
    %v143 = vunpack.c.l.b16 %v101
    %v144 = vunpack.c.l.b16 %v102
    %v145 = vunpack.c.l.b16 %v103
    %v146 = vunpack.c.l.b16 %v104
    %v147 = vunpack.c.l.b16 %v105
    %v148 = vpack.c.b16 %v128, %v127
    %v149 = vpack.c.b16 %v130, %v129
    %v150 = vpack.c.b16 %v132, %v131
    %v151 = vpack.c.b16 %v134, %v133
    %v152 = vpack.c.b16 %v136, %v135
    %v153 = vpack.c.b16 %v138, %v137
    %v154 = vpack.c.b16 %v140, %v139
    %v155 = vpack.c.b16 %v142, %v141
    %v156 = vpack.c.b16 %v144, %v143
    %v157 = vpack.c.b16 %v146, %v145
    %v158 = vpack.c.b16 %v147, %v147
    %vm169 = vcmask 326656
    %v171 = vsel %vm169, %v84, 0
    %vm173 = vcmask 1043456
    %v175 = vsel %vm173, %v158, 0
    %177 = vmatprep.subr.bf16.mxu0 0
    %178 = vmatpush1.bf16.msra.mxu0 %v148
    %179 = vmatprep.subr.bf16.mxu0 0
    %180 = vmatpush1.bf16.msra.mxu0 %v149
    %181 = vmatprep.subr.bf16.mxu0 0
    %182 = vmatpush1.bf16.msra.mxu0 %v150
    %183 = vmatprep.subr.bf16.mxu0 0
    %184 = vmatpush1.bf16.msra.mxu0 %v151
    %185 = vmatprep.subr.bf16.mxu0 0
    %186 = vmatpush1.bf16.msra.mxu0 %v152
    %187 = vmatprep.subr.bf16.mxu0 0
    %188 = vmatpush1.bf16.msra.mxu0 %v153
    %189 = vmatprep.subr.bf16.mxu0 0
    %190 = vmatpush1.bf16.msra.mxu0 %v154
    %191 = vmatprep.subr.bf16.mxu0 0
    %192 = vmatpush1.bf16.msra.mxu0 %v155
    %193 = vmatprep.subr.bf16.mxu0 0
    %194 = vmatpush1.bf16.msra.mxu0 %v156
    %195 = vmatprep.subr.bf16.mxu0 0
    %196 = vmatpush1.bf16.msra.mxu0 %v157
    %197 = vmatprep.subr.bf16.mxu0 0
    %198 = vmatpush1.bf16.msra.mxu0 %v175
    %199 = vmatprep.subr.bf16.mxu0 0
    %200 = vmatpush1.bf16.msra.mxu0 0
    %201 = vmatprep.subr.bf16.mxu0 0
    %202 = vmatpush1.bf16.msra.mxu0 0
    %203 = vmatprep.subr.bf16.mxu0 0
    %204 = vmatpush1.bf16.msra.mxu0 0
    %205 = vmatprep.subr.bf16.mxu0 0
    %206 = vmatpush1.bf16.msra.mxu0 0
    %207 = vmatprep.subr.bf16.mxu0 0
    %208 = vmatpush1.bf16.msra.mxu0 0
    %209 = vmatprep.mubr.bf16.mxu0 %v171
    %210 = vmatmul.mubr.bf16.gmra.mrb[0].mxu0 %v83
    %v211 = vpop.f32.mrb[0].mxu0
    %v212 = vadd.f32 0.0, %v211
    %v213 = vpop.f32.mrb[0].mxu0
    %v214 = vpop.f32.mrb[0].mxu0
    %v215 = vpop.f32.mrb[0].mxu0
    %216 = vdwg.mxu0
    %v217 = vxor.u32 %v212, 2147483648
    %v218 = vmul.f32 %v217, 1.442695
    %v219 = vpow.pop %v218
    %v220 = vadd.f32 %v219, 1.0
    %v221 = vrcp.pop %v220
    %v222 = vmul.f32 1.0, %v221
    %224 = vrot.lane.b32.xlu0 %v212, 32
    %v225 = vpop.permute.xlu0 %224
    %v227 = vmul.f32 %v222, %v225
    %229 = vrot.lane.b32.xlu0 %v227, 64
    %v230 = vpop.permute.xlu0 %229
    %v232 = vadd.f32 %v212, %v230
    %v233 = vtanh.pop %v232
    %v234 = vsub.f32 1.0, %v222
    %236 = vrot.lane.b32.xlu0 %v233, 96
    %v237 = vpop.permute.xlu0 %236
    %v239 = vmul.f32 %v234, %v237
    %241 = vrot.lane.b32.xlu0 %v64, 32
    %v242 = vpop.permute.xlu0 %241
    %v244 = vmul.f32 %v222, %v242
    %v245 = vadd.f32 %v239, %v244
    %v246 = vmax.f32 %v245, 0.0
    %248 = vrot.lane.b32.xlu0 %v246, 96
    %v249 = vpop.permute.xlu0 %248
    %251 = vrot.lane.b32.xlu0 %v76, 64
    %v252 = vpop.permute.xlu0 %251
    %v254 = vsel %vm81, %v249, %v245
    %vm255 = vcmask 523264
    %v256 = vsel %vm255, %v254, %v252
    %v257 = vpack.c.bf16 %v256, %v256
    %v258 = vld [vmem:[#allocation7] sm:$0xf]
    %v259 = vld [vmem:[#allocation7 + $0x4] sm:$0xf]
    %v260 = vld [vmem:[#allocation7 + $0x8] sm:$0xf]
    %v261 = vld [vmem:[#allocation7 + $0xc] sm:$0xf]
    %v262 = vld [vmem:[#allocation7 + $0x10] sm:$0xf]
    %v263 = vld [vmem:[#allocation7 + $0x14] sm:$0xf]
    %v264 = vld [vmem:[#allocation7 + $0x18] sm:$0xf]
    %v265 = vld [vmem:[#allocation7 + $0x1c] sm:$0xf]
    %v266 = vld [vmem:[#allocation7 + $0x20] sm:$0xf]
    %v276 = vunpack.c.l.b16 %v258
    %v277 = vunpack.c.l.b16 %v259
    %v278 = vunpack.c.l.b16 %v260
    %v279 = vunpack.c.l.b16 %v261
    %v280 = vunpack.c.l.b16 %v262
    %v281 = vunpack.c.l.b16 %v263
    %v282 = vunpack.c.l.b16 %v264
    %v283 = vunpack.c.l.b16 %v265
    %v284 = vunpack.c.l.b16 %v266
    %v285 = vpack.c.b16 %v277, %v276
    %v286 = vpack.c.b16 %v279, %v278
    %v287 = vpack.c.b16 %v281, %v280
    %v288 = vpack.c.b16 %v283, %v282
    %v289 = vpack.c.b16 %v284, %v284
    %vm294 = vcmask 588800
    %v296 = vsel %vm294, %v257, 0
    %v299 = vsel %vm173, %v289, 0
    %301 = vmatprep.subr.bf16.mxu0 0
    %302 = vmatpush1.bf16.msra.mxu0 %v285
    %303 = vmatprep.subr.bf16.mxu0 0
    %304 = vmatpush1.bf16.msra.mxu0 %v286
    %305 = vmatprep.subr.bf16.mxu0 0
    %306 = vmatpush1.bf16.msra.mxu0 %v287
    %307 = vmatprep.subr.bf16.mxu0 0
    %308 = vmatpush1.bf16.msra.mxu0 %v288
    %309 = vmatprep.subr.bf16.mxu0 0
    %310 = vmatpush1.bf16.msra.mxu0 %v299
    %311 = vmatprep.subr.bf16.mxu0 0
    %312 = vmatpush1.bf16.msra.mxu0 0
    %313 = vmatprep.subr.bf16.mxu0 0
    %314 = vmatpush1.bf16.msra.mxu0 0
    %315 = vmatprep.subr.bf16.mxu0 0
    %316 = vmatpush1.bf16.msra.mxu0 0
    %317 = vmatprep.subr.bf16.mxu0 0
    %318 = vmatpush1.bf16.msra.mxu0 0
    %319 = vmatprep.subr.bf16.mxu0 0
    %320 = vmatpush1.bf16.msra.mxu0 0
    %321 = vmatprep.subr.bf16.mxu0 0
    %322 = vmatpush1.bf16.msra.mxu0 0
    %323 = vmatprep.subr.bf16.mxu0 0
    %324 = vmatpush1.bf16.msra.mxu0 0
    %325 = vmatprep.subr.bf16.mxu0 0
    %326 = vmatpush1.bf16.msra.mxu0 0
    %327 = vmatprep.subr.bf16.mxu0 0
    %328 = vmatpush1.bf16.msra.mxu0 0
    %329 = vmatprep.subr.bf16.mxu0 0
    %330 = vmatpush1.bf16.msra.mxu0 0
    %331 = vmatprep.subr.bf16.mxu0 0
    %332 = vmatpush1.bf16.msra.mxu0 0
    %333 = vmatprep.mubr.bf16.mxu0 0
    %334 = vmatmul.mubr.bf16.gmra.mrb[0].mxu0 %v296
    %v335 = vpop.f32.mrb[0].mxu0
    %v336 = vadd.f32 0.0, %v335
    %v337 = vpop.f32.mrb[0].mxu0
    %v338 = vpop.f32.mrb[0].mxu0
    %v339 = vpop.f32.mrb[0].mxu0
    %340 = vdwg.mxu0
    %v341 = vxor.u32 %v336, 2147483648
    %v342 = vmul.f32 %v341, 1.442695
    %v343 = vpow.pop %v342
    %v344 = vadd.f32 %v343, 1.0
    %v345 = vrcp.pop %v344
    %v346 = vmul.f32 1.0, %v345
    %348 = vrot.lane.b32.xlu0 %v336, 32
    %v349 = vpop.permute.xlu0 %348
    %v351 = vmul.f32 %v346, %v349
    %353 = vrot.lane.b32.xlu0 %v351, 64
    %v354 = vpop.permute.xlu0 %353
    %v356 = vadd.f32 %v336, %v354
    %v357 = vtanh.pop %v356
    %v358 = vsub.f32 1.0, %v346
    %360 = vrot.lane.b32.xlu0 %v357, 96
    %v361 = vpop.permute.xlu0 %360
    %v363 = vmul.f32 %v358, %v361
    %v364 = vmul.f32 %v346, %v245
    %v365 = vadd.f32 %v363, %v364
    %367 = vrot.lane.b32.xlu0 %v365, 96
    %v368 = vpop.permute.xlu0 %367
    %v370 = vsel %vm81, %v368, %v79
    %v371 = vpack.c.bf16 %v370, %v370
    %v372 = vld [vmem:[%s4] sm:$0xf]
    %v373 = vld [vmem:[%s4 + $0x4] sm:$0xf]
    %v374 = vld [vmem:[%s4 + $0x8] sm:$0xf]
    %v375 = vld [vmem:[%s4 + $0xc] sm:$0xf]
    %v376 = vld [vmem:[%s4 + $0x10] sm:$0xf]
    %v382 = vunpack.c.l.b16 %v372
    %v383 = vunpack.c.l.b16 %v373
    %v384 = vunpack.c.l.b16 %v374
    %v385 = vunpack.c.l.b16 %v375
    %v386 = vunpack.c.l.b16 %v376
    %v387 = vpack.c.b16 %v383, %v382
    %v388 = vpack.c.b16 %v385, %v384
    %v389 = vpack.c.b16 %v386, %v386
    %v393 = vsel %vm169, %v371, 0
    %v396 = vsel %vm173, %v389, 0
    %398 = vmatprep.subr.bf16.mxu0 0
    %399 = vmatpush1.bf16.msra.mxu0 %v387
    %400 = vmatprep.subr.bf16.mxu0 0
    %401 = vmatpush1.bf16.msra.mxu0 %v388
    %402 = vmatprep.subr.bf16.mxu0 0
    %403 = vmatpush1.bf16.msra.mxu0 %v396
    %404 = vmatprep.subr.bf16.mxu0 0
    %405 = vmatpush1.bf16.msra.mxu0 0
    %406 = vmatprep.subr.bf16.mxu0 0
    %407 = vmatpush1.bf16.msra.mxu0 0
    %408 = vmatprep.subr.bf16.mxu0 0
    %409 = vmatpush1.bf16.msra.mxu0 0
    %410 = vmatprep.subr.bf16.mxu0 0
    %411 = vmatpush1.bf16.msra.mxu0 0
    %412 = vmatprep.subr.bf16.mxu0 0
    %413 = vmatpush1.bf16.msra.mxu0 0
    %414 = vmatprep.subr.bf16.mxu0 0
    %415 = vmatpush1.bf16.msra.mxu0 0
    %416 = vmatprep.subr.bf16.mxu0 0
    %417 = vmatpush1.bf16.msra.mxu0 0
    %418 = vmatprep.subr.bf16.mxu0 0
    %419 = vmatpush1.bf16.msra.mxu0 0
    %420 = vmatprep.subr.bf16.mxu0 0
    %421 = vmatpush1.bf16.msra.mxu0 0
    %422 = vmatprep.subr.bf16.mxu0 0
    %423 = vmatpush1.bf16.msra.mxu0 0
    %424 = vmatprep.subr.bf16.mxu0 0
    %425 = vmatpush1.bf16.msra.mxu0 0
    %426 = vmatprep.subr.bf16.mxu0 0
    %427 = vmatpush1.bf16.msra.mxu0 0
    %428 = vmatprep.subr.bf16.mxu0 0
    %429 = vmatpush1.bf16.msra.mxu0 0
    %430 = vmatprep.mubr.bf16.mxu0 0
    %431 = vmatmul.mubr.bf16.gmra.mrb[0].mxu0 %v393
    %v432 = vpop.f32.mrb[0].mxu0
    %v433 = vadd.f32 0.0, %v432
    %v434 = vpop.f32.mrb[0].mxu0
    %v435 = vpop.f32.mrb[0].mxu0
    %v436 = vpop.f32.mrb[0].mxu0
    %437 = vdwg.mxu0
    %438 = vmax.xlane.f32.xlu0 %v433
    %v439 = vpop.xlane.xlu0 %438
    %v440 = vsub.f32 %v433, %v439
    %v441 = vmul.f32 %v440, 1.442695
    %v442 = vpow.pop %v441
    %443 = vadd.xlane.f32.xlu0 %v442
    %v444 = vpop.xlane.xlu0 %443
    %v445 = vlog2.pop %v444
    %v446 = vmul.f32 %v445, 0.6931472
    %v447 = vsub.f32 %v440, %v446
    %448 = vst [vmem:[#allocation8] sm:$0xff] %v447
    %449 = vst.msk [vmem:[#allocation9] sm:$0xff] %vm81, %v368
    // Predicated region
    $region34: #{tpu_custom_call.1} parent=1 // pred_check
      _
    $region35: #{tpu_custom_call.1} parent=1 // pred_check_branch
      %451 = sbr.rel (0) target = $region37
    $region36: #{tpu_custom_call.1} parent=1 // pred_region
      %s453 = ssub.s32 128, 128
      %454 = vsyncadd [#allocation4], %s453
      %s456 = sshll.u32 [#allocation8], 4
      %s457 = int_to_ptr.vmem [resolvable:$true] %s456
      %459 = dma.vmem_to_hbm [thread:$0]  %s457, 128, %s5, [#allocation4]
    $region37: #{tpu_custom_call.1} parent=1 // pred_fallthru
      _
    // Predicated region
    $region38: #{tpu_custom_call.1} parent=1 // pred_check
      _
    $region39: #{tpu_custom_call.1} parent=1 // pred_check_branch
      %461 = sbr.rel (0) target = $region41
    $region40: #{tpu_custom_call.1} parent=1 // pred_region
      %s463 = ssub.s32 128, 128
      %464 = vsyncadd [#allocation10], %s463
      %s466 = sshll.u32 [#allocation9], 4
      %s467 = int_to_ptr.vmem [resolvable:$true] %s466
      %469 = dma.vmem_to_hbm [thread:$0]  %s467, 128, %s6, [#allocation10]
    $region41: #{tpu_custom_call.1} parent=1 // pred_fallthru
      _
    // Predicated region
    $region42: #{tpu_custom_call.1} parent=1 // pred_check
      _
    $region43: #{tpu_custom_call.1} parent=1 // pred_check_branch
      %471 = sbr.rel (0) target = $region45
    $region44: #{tpu_custom_call.1} parent=1 // pred_region
      %472 = dma.done [#allocation4], 128
    $region45: #{tpu_custom_call.1} parent=1 // pred_fallthru
      _
    // Predicated region
    $region46: #{tpu_custom_call.1} parent=1 // pred_check
      _
    $region47: #{tpu_custom_call.1} parent=1 // pred_check_branch
      %474 = sbr.rel (0) target = $region49
    $region48: #{tpu_custom_call.1} parent=1 // pred_region
      %475 = dma.done [#allocation10], 128
    $region49: #{tpu_custom_call.1} parent=1 // pred_fallthru
      _
    %476 = vsyncpa [#allocation3], 1
    %477 = vsyncpa [#allocation6], 1
    %478 = vsyncpa [#allocation4], 1
    %479 = vsyncpa [#allocation10], 1

</llo_original>
